<compile_context>
chip_gen: v5e
topology: v5e:2x2
jax: 0.10.0
libtpu: 0.0.40
codegen_flags: <defaults>
</compile_context>

<pallas_src>
import jax
import jax.numpy as jnp
from jax import lax
from jax.experimental import pallas as pl
from jax.experimental.pallas import tpu as pltpu


def _round_up(n: int, m: int) -> int:
    return ((n + m - 1) // m) * m


def mlp_kernel(x_ref, w1_ref, b1_ref, w2_ref, b2_ref, w3t_ref, b3_ref, o_ref):
    # Layer 1: bf16 operands into the MXU, f32 accumulation; bias+ReLU on the VPU (f32).
    x = x_ref[...].astype(jnp.bfloat16)
    h1 = jnp.dot(x, w1_ref[...], preferred_element_type=jnp.float32)
    h1 = jnp.maximum(h1 + b1_ref[...], 0.0)

    # Layer 2: same recipe.
    h2 = jnp.dot(h1.astype(jnp.bfloat16), w2_ref[...], preferred_element_type=jnp.float32)
    h2 = jnp.maximum(h2 + b2_ref[...], 0.0)

    # Layer 3 (out_features == 1): produce a lane-dense (1, block_m) row directly by
    # contracting the hidden2 axis of w3_row (1, hidden2) against the hidden2 axis of
    # h2 (block_m, hidden2) on the now-idle MXU. The output DMA is then a full-lane
    # unmasked store instead of a 1-lane-wide masked store.
    out_row = lax.dot_general(
        w3t_ref[...], h2,
        dimension_numbers=(((1,), (1,)), ((), ())),
        preferred_element_type=jnp.float32)                   # (1, block_m)
    o_ref[...] = (out_row + b3_ref[0, 0]).astype(o_ref.dtype)  # b3 is an SMEM scalar


def _vmem_bytes(block_m, feat, hidden, hidden2, x_itemsize, weight_buffers, x_buffers):
    """Rough VMEM-resident-bytes estimate used to size block_m / vmem_limit_bytes."""
    lane = 128
    pad = lambda n: _round_up(max(n, 1), lane)
    xb = x_buffers * block_m * pad(feat) * x_itemsize                   # x tile stream
    wb = weight_buffers * 2 * (_round_up(feat, 16) * pad(hidden)
                               + _round_up(hidden, 16) * pad(hidden2))  # bf16 w1, w2
    bb = weight_buffers * 4 * (8 * pad(hidden) + 2 * 8 * pad(hidden2))  # b1, b2, w3 row (f32)
    ob = 2 * 8 * _round_up(block_m, lane) * 4                           # (1, block_m) out row
    hb = block_m * (pad(hidden) + pad(hidden2)) * 4                     # live h1 / h2 activations
    return xb + wb + bb + ob + hb


def _tpu_vmem_and_cores():
    """Per-generation VMEM capacity and (heuristic) TensorCores-per-chip."""
    vmem_cap = 64 * 1024 * 1024  # conservative default (v7x-sized)
    num_tc = 1
    try:
        info = pltpu.get_tpu_info()
        vmem_cap = int(info.vmem_capacity_bytes)
        # 64 MiB/TC parts (v7x) have 2 TensorCores per chip; 128 MiB parts have 1.
        num_tc = 2 if vmem_cap <= 80 * 1024 * 1024 else 1
    except Exception:
        pass
    return vmem_cap, num_tc


def simple_baseline_forward(x, params, *, block_m=None, single_buffer_weights=True,
                            x_buffer_count=2):
    """Forward pass of SimpleBaseLine.

    x:      [batch, input_feature] (float32 or bfloat16)
    params: dict with w1 [F,H], b1 [1,H], w2 [H,H//2], b2 [1,H//2], w3 [H//2,1], b3 [1,1]
    returns [batch, 1] float32
    """
    # bf16 weights for the MXU (no-op if already stored bf16 at init time);
    # biases and the final w3 row stay f32.
    w1 = params["w1"] if params["w1"].dtype == jnp.bfloat16 else params["w1"].astype(jnp.bfloat16)
    w2 = params["w2"] if params["w2"].dtype == jnp.bfloat16 else params["w2"].astype(jnp.bfloat16)
    b1 = params["b1"].astype(jnp.float32)
    b2 = params["b2"].astype(jnp.float32)
    w3t = params["w3"].reshape(1, -1).astype(jnp.float32)    # (1, hidden2) row
    b3 = params["b3"].reshape(1, 1).astype(jnp.float32)      # scalar -> SMEM

    batch, feat = x.shape
    hidden = w1.shape[1]
    hidden2 = w2.shape[1]

    vmem_cap, num_tc = _tpu_vmem_and_cores()
    # Generation-aware resident-bytes budget: ~48 MiB on 64 MiB/TC parts (v7x),
    # up to ~100 MiB on the 128 MiB parts (v5e/v6e).
    budget = min(max(vmem_cap - 16 * 1024 * 1024, 24 * 1024 * 1024), 100 * 1024 * 1024)

    weight_buffers = 1 if single_buffer_weights else 2
    x_buffers = max(2, int(x_buffer_count))

    # Lane-dense output (1, block_m) requires block_m % 128 == 0 (or == padded batch).
    lane_block = 128
    padded_target = _round_up(batch, lane_block)
    if block_m is None:
        if num_tc >= 2:
            # >= 2 grid steps per TensorCore so each core still pipelines its x DMA.
            block_m = max(lane_block, _round_up(pl.cdiv(padded_target, 2 * num_tc), lane_block))
        else:
            # Single TC: one big step (no per-step overhead); shrunk below if over budget.
            block_m = padded_target
    block_m = max(lane_block, _round_up(block_m, lane_block))
    block_m = min(block_m, padded_target)

    # Shrink block_m until the resident estimate fits the per-generation budget.
    while block_m > lane_block and _vmem_bytes(
            block_m, feat, hidden, hidden2, x.dtype.itemsize, weight_buffers, x_buffers) > budget:
        block_m = max(lane_block, _round_up(block_m // 2, lane_block))

    if _vmem_bytes(block_m, feat, hidden, hidden2, x.dtype.itemsize,
                   weight_buffers, x_buffers) > budget:
        # TODO(synk): add a K-tiling reduction grid axis over `feat` (and `hidden`) with an
        # f32 VMEM accumulator + pl.when init/finalize so w1/w2 stream through VMEM when the
        # weights alone exceed the per-generation budget (matters for huge hidden on v7x).
        pass

    padded_batch = _round_up(batch, block_m)
    if padded_batch != batch:
        x = jnp.pad(x, ((0, padded_batch - batch), (0, 0)))
    grid = (padded_batch // block_m,)

    # Constant-index (replicated) blocks are DMA'd once across the whole grid; their
    # second pipeline buffer is reclaimed via pipeline_mode=pl.Buffered(1) by default.
    const_kwargs = dict(pipeline_mode=pl.Buffered(1)) if single_buffer_weights else {}

    def const_spec(shape):
        return pl.BlockSpec(shape, lambda i: (0, 0), **const_kwargs)

    x_kwargs = dict(pipeline_mode=pl.Buffered(x_buffers)) if x_buffers != 2 else {}
    x_spec = pl.BlockSpec((block_m, feat), lambda i: (i, 0), **x_kwargs)

    flops = 2 * padded_batch * (feat * hidden + hidden * hidden2 + hidden2)
    bytes_accessed = (
        padded_batch * feat * x.dtype.itemsize
        + w1.size * 2 + b1.size * 4
        + w2.size * 2 + b2.size * 4
        + w3t.size * 4 + 4
        + padded_batch * 4
    )

    est = _vmem_bytes(block_m, feat, hidden, hidden2, x.dtype.itemsize,
                      weight_buffers, x_buffers)
    # Never go below the platform scoped default; never past capacity minus headroom.
    vmem_limit = int(min(max(est + 8 * 1024 * 1024, 32 * 1024 * 1024),
                         max(vmem_cap - 4 * 1024 * 1024, 32 * 1024 * 1024)))

    out = pl.pallas_call(
        mlp_kernel,
        out_shape=jax.ShapeDtypeStruct((1, padded_batch), jnp.float32),
        grid_spec=pltpu.PrefetchScalarGridSpec(
            num_scalar_prefetch=0,
            grid=grid,
            in_specs=[
                x_spec,                                              # x tile (streamed over batch)
                const_spec((feat, hidden)),                          # w1  (bf16)
                const_spec((1, hidden)),                             # b1  (f32)
                const_spec((hidden, hidden2)),                       # w2  (bf16)
                const_spec((1, hidden2)),                            # b2  (f32)
                const_spec((1, hidden2)),                            # w3 row (f32)
                pl.BlockSpec(memory_space=pltpu.MemorySpace.SMEM),   # b3 scalar in SMEM
            ],
            # Lane-dense output slab: (1, block_m) per grid step.
            out_specs=pl.BlockSpec((1, block_m), lambda i: (0, i)),
        ),
        compiler_params=pltpu.CompilerParams(
            dimension_semantics=("parallel",),
            vmem_limit_bytes=vmem_limit,
        ),
        cost_estimate=pl.CostEstimate(
            flops=flops, transcendentals=0, bytes_accessed=bytes_accessed),
    )(x, w1, b1, w2, b2, w3t, b3)

    # (1, padded_batch) -> [batch, 1]
    return out[0, :batch].reshape(batch, 1)


def init_params(key, input_feature, hidden_size):
    """Deterministic parameter init (matches nn.Linear shapes, stored transposed).

    Weights that feed the MXU (w1, w2) are stored in bf16 once here, so the forward
    pass never pays a per-call HBM convert."""
    h2 = hidden_size // 2
    keys = jax.random.split(key, 6)

    def u(k, shape, fan_in):  # PyTorch-style uniform(-1/sqrt(fan_in), 1/sqrt(fan_in))
        bound = 1.0 / jnp.sqrt(fan_in)
        return jax.random.uniform(k, shape, jnp.float32, -bound, bound)

    return {
        "w1": u(keys[0], (input_feature, hidden_size), input_feature).astype(jnp.bfloat16),
        "b1": u(keys[1], (1, hidden_size), input_feature),
        "w2": u(keys[2], (hidden_size, h2), hidden_size).astype(jnp.bfloat16),
        "b2": u(keys[3], (1, h2), hidden_size),
        "w3": u(keys[4], (h2, 1), h2),
        "b3": u(keys[5], (1, 1), h2),
    }


def reference_forward(x, params):
    w1 = params["w1"].astype(jnp.float32)
    w2 = params["w2"].astype(jnp.float32)
    h1 = jnp.maximum(x @ w1 + params["b1"], 0.0)
    h2 = jnp.maximum(h1 @ w2 + params["b2"], 0.0)
    return h2 @ params["w3"] + params["b3"]


if __name__ == "__main__":
    batch = 64
    input_feature = 16
    hidden_size = 32

    key = jax.random.PRNGKey(0)
    kx, kp = jax.random.split(key)
    x = jax.random.normal(kx, (batch, input_feature), jnp.float32)
    params = init_params(kp, input_feature, hidden_size)

    # Default heuristic: one 128-row lane-dense step on 1-TC chips, >=4 steps on v7x.
    out = simple_baseline_forward(x, params)
    out = jax.block_until_ready(out)

    ref = reference_forward(x, params)
    assert out.shape == (batch, 1), out.shape
    # bf16 MXU operands -> loosened tolerance vs the pure-f32 reference.
    assert jnp.allclose(out, ref, atol=5e-2, rtol=5e-2), "mismatch vs reference"

    print("KERNEL_OK")
</pallas_src>

<mosaic_0001>
module attributes {stable_mosaic.version = 11 : i64} {
  func.func @mlp_kernel(%arg0: i32, %arg1: memref<128x16xf32, #tpu.memory_space<vmem>>, %arg2: memref<16x32xbf16, #tpu.memory_space<vmem>>, %arg3: memref<1x32xf32, #tpu.memory_space<vmem>>, %arg4: memref<32x16xbf16, #tpu.memory_space<vmem>>, %arg5: memref<1x16xf32, #tpu.memory_space<vmem>>, %arg6: memref<1x16xf32, #tpu.memory_space<vmem>>, %arg7: memref<1x1xf32, #tpu.memory_space<smem>>, %arg8: memref<1x128xf32, #tpu.memory_space<vmem>>) attributes {dimension_semantics = [#tpu.dimension_semantics<parallel>], iteration_bounds = array<i64: 1>, scalar_prefetch = 0 : i64, scratch_operands = 0 : i64, tpu.core_type = #tpu.core_type<tc>, window_params = [{transform_indices = @transform_0, window_bounds = array<i64: 128, 16>}, {pipeline_mode = #tpu.pipeline_mode<synchronous>, transform_indices = @transform_1, window_bounds = array<i64: 16, 32>}, {pipeline_mode = #tpu.pipeline_mode<synchronous>, transform_indices = @transform_2, window_bounds = array<i64: 1, 32>}, {pipeline_mode = #tpu.pipeline_mode<synchronous>, transform_indices = @transform_3, window_bounds = array<i64: 32, 16>}, {pipeline_mode = #tpu.pipeline_mode<synchronous>, transform_indices = @transform_4, window_bounds = array<i64: 1, 16>}, {pipeline_mode = #tpu.pipeline_mode<synchronous>, transform_indices = @transform_5, window_bounds = array<i64: 1, 16>}, {transform_indices = @transform_6, window_bounds = array<i64: 1, 1>}, {transform_indices = @transform_7, window_bounds = array<i64: 1, 128>}]} {
    %c0 = arith.constant 0 : index
    %c0_0 = arith.constant 0 : index
    %0 = vector.load %arg1[%c0, %c0_0] : memref<128x16xf32, #tpu.memory_space<vmem>>, vector<128x16xf32>
    %1 = arith.truncf %0 : vector<128x16xf32> to vector<128x16xbf16>
    %c0_1 = arith.constant 0 : index
    %c0_2 = arith.constant 0 : index
    %2 = vector.load %arg2[%c0_1, %c0_2] : memref<16x32xbf16, #tpu.memory_space<vmem>>, vector<16x32xbf16>
    %cst = arith.constant dense<0.000000e+00> : vector<128x32xf32>
    %3 = tpu.matmul %1, %2, %cst {dimension_numbers = #tpu.dot_dimension_numbers<[1], [0], [0], [1], [0, 0, 1, 1], [], []>} : vector<128x16xbf16>, vector<16x32xbf16>, vector<128x32xf32> -> vector<128x32xf32>
    %c0_3 = arith.constant 0 : index
    %c0_4 = arith.constant 0 : index
    %4 = vector.load %arg3[%c0_3, %c0_4] : memref<1x32xf32, #tpu.memory_space<vmem>>, vector<1x32xf32>
    %5 = vector.broadcast %4 : vector<1x32xf32> to vector<128x32xf32>
    %6 = arith.addf %3, %5 : vector<128x32xf32>
    %cst_5 = arith.constant 0.000000e+00 : f32
    %7 = vector.broadcast %cst_5 : f32 to vector<128x32xf32>
    %8 = arith.maximumf %6, %7 : vector<128x32xf32>
    %9 = arith.truncf %8 : vector<128x32xf32> to vector<128x32xbf16>
    %c0_6 = arith.constant 0 : index
    %c0_7 = arith.constant 0 : index
    %10 = vector.load %arg4[%c0_6, %c0_7] : memref<32x16xbf16, #tpu.memory_space<vmem>>, vector<32x16xbf16>
    %cst_8 = arith.constant dense<0.000000e+00> : vector<128x16xf32>
    %11 = tpu.matmul %9, %10, %cst_8 {dimension_numbers = #tpu.dot_dimension_numbers<[1], [0], [0], [1], [0, 0, 1, 1], [], []>} : vector<128x32xbf16>, vector<32x16xbf16>, vector<128x16xf32> -> vector<128x16xf32>
    %c0_9 = arith.constant 0 : index
    %c0_10 = arith.constant 0 : index
    %12 = vector.load %arg5[%c0_9, %c0_10] : memref<1x16xf32, #tpu.memory_space<vmem>>, vector<1x16xf32>
    %13 = vector.broadcast %12 : vector<1x16xf32> to vector<128x16xf32>
    %14 = arith.addf %11, %13 : vector<128x16xf32>
    %cst_11 = arith.constant 0.000000e+00 : f32
    %15 = vector.broadcast %cst_11 : f32 to vector<128x16xf32>
    %16 = arith.maximumf %14, %15 : vector<128x16xf32>
    %c0_12 = arith.constant 0 : index
    %c0_13 = arith.constant 0 : index
    %17 = vector.load %arg6[%c0_12, %c0_13] : memref<1x16xf32, #tpu.memory_space<vmem>>, vector<1x16xf32>
    %cst_14 = arith.constant dense<0.000000e+00> : vector<1x128xf32>
    %18 = tpu.matmul %17, %16, %cst_14 {dimension_numbers = #tpu.dot_dimension_numbers<[1], [1], [0], [0], [0, 0, 1, 0], [], []>} : vector<1x16xf32>, vector<128x16xf32>, vector<1x128xf32> -> vector<1x128xf32>
    %c0_15 = arith.constant 0 : index
    %c0_16 = arith.constant 0 : index
    %19 = memref.load %arg7[%c0_15, %c0_16] : memref<1x1xf32, #tpu.memory_space<smem>>
    %20 = vector.broadcast %19 : f32 to vector<1x128xf32>
    %21 = arith.addf %18, %20 : vector<1x128xf32>
    %c0_17 = arith.constant 0 : index
    %c0_18 = arith.constant 0 : index
    %22 = vector.load %arg8[%c0_17, %c0_18] : memref<1x128xf32, #tpu.memory_space<vmem>>, vector<1x128xf32>
    tpu.vector_store %arg8[%c0_17, %c0_18], %21 {strides = array<i32>} : memref<1x128xf32, #tpu.memory_space<vmem>>, vector<1x128xf32>,
    return
  }
  func.func @transform_0(%arg0: i32) -> (i32, i32) {
    %c0_i32 = arith.constant 0 : i32
    %c0_i32_0 = arith.constant 0 : i32
    return %arg0, %c0_i32 : i32, i32
  }
  func.func @transform_1(%arg0: i32) -> (i32, i32) {
    %c0_i32 = arith.constant 0 : i32
    %c0_i32_0 = arith.constant 0 : i32
    %c0_i32_1 = arith.constant 0 : i32
    return %c0_i32, %c0_i32_0 : i32, i32
  }
  func.func @transform_2(%arg0: i32) -> (i32, i32) {
    %c0_i32 = arith.constant 0 : i32
    %c0_i32_0 = arith.constant 0 : i32
    %c0_i32_1 = arith.constant 0 : i32
    return %c0_i32, %c0_i32_0 : i32, i32
  }
  func.func @transform_3(%arg0: i32) -> (i32, i32) {
    %c0_i32 = arith.constant 0 : i32
    %c0_i32_0 = arith.constant 0 : i32
    %c0_i32_1 = arith.constant 0 : i32
    return %c0_i32, %c0_i32_0 : i32, i32
  }
  func.func @transform_4(%arg0: i32) -> (i32, i32) {
    %c0_i32 = arith.constant 0 : i32
    %c0_i32_0 = arith.constant 0 : i32
    %c0_i32_1 = arith.constant 0 : i32
    return %c0_i32, %c0_i32_0 : i32, i32
  }
  func.func @transform_5(%arg0: i32) -> (i32, i32) {
    %c0_i32 = arith.constant 0 : i32
    %c0_i32_0 = arith.constant 0 : i32
    %c0_i32_1 = arith.constant 0 : i32
    return %c0_i32, %c0_i32_0 : i32, i32
  }
  func.func @transform_6(%arg0: i32) -> (i32, i32) {
    %c0_i32 = arith.constant 0 : i32
    %c0_i32_0 = arith.constant 0 : i32
    %c0_i32_1 = arith.constant 0 : i32
    return %c0_i32, %c0_i32_0 : i32, i32
  }
  func.func @transform_7(%arg0: i32) -> (i32, i32) {
    %c0_i32 = arith.constant 0 : i32
    %c0_i32_0 = arith.constant 0 : i32
    return %c0_i32, %arg0 : i32, i32
  }
}

</mosaic_0001>

<llo_original>
// kernel: tpu_custom_call.1
$region0: #{tpu_custom_call.1}
  #allocation0 [shape = 'u32[]', space=smem, size = 0x4, offset = 0x4, fixed_abs, tag = 'smem constant byte address 0x4 - core index']
  #allocation1 [shape = 'u32[72,128]{1,0:T(1,128)}', space=vmem, size = 0x9000, scoped, tag = 'internal scratch']
  #allocation2 [shape = 'f32[1,1]{1,0:T(1,128)S(6)}', space=smem, size = 0x200, scoped, tag = 'scoped memory for tpu_custom_call.1']
  %s0 = inlined_call_operand.vmem [shape: f32[128,16], index: 0, kind: input, shape index: {}]
  %s1 = inlined_call_operand.vmem [shape: bf16[16,32], index: 1, kind: input, shape index: {}]
  %s2 = inlined_call_operand.vmem [shape: f32[1,32], index: 2, kind: input, shape index: {}]
  %s3 = inlined_call_operand.vmem [shape: bf16[32,16], index: 3, kind: input, shape index: {}]
  %s4 = inlined_call_operand.vmem [shape: f32[1,16], index: 4, kind: input, shape index: {}]
  %s5 = inlined_call_operand.vmem [shape: f32[1,16], index: 5, kind: input, shape index: {}]
  %s6 = inlined_call_operand.<no memory space> [shape: f32[1,1], index: 6, kind: input, shape index: {}]
  %s7 = inlined_call_operand.hbm [shape: f32[1,128], index: 7, kind: output, shape index: {}]
  %s8 = sld [smem:[#allocation0]]
  $region38: #{tpu_custom_call.1} parent=0
    _
  %s10 = ssub.s32 1, %s8
  %s11 = scalar_select 0, %s10, %s8
  %12 = sst [smem:[#allocation2]] %s6
  $region1: #{tpu_custom_call.1} parent=0
    #allocation3 [shape = 'u8[512]{0}', space=vmem, size = 0x400, scoped, tag = 'output window, operand 0, single buffered']
    #allocation4 [shape = 's32[1]{0}', space=sflag, size = 0x4, scoped, tag = 'scoped memory for tpu_custom_call.1']
    %13 = vsyncpa [#allocation4], 0
    // Predicated region
    $region2: #{tpu_custom_call.1} parent=1 // pred_check
      _
    $region3: #{tpu_custom_call.1} parent=1 // pred_check_branch
      %15 = sbr.rel (0) target = $region5
    $region4: #{tpu_custom_call.1} parent=1 // pred_region
      _
    $region5: #{tpu_custom_call.1} parent=1 // pred_fallthru
      _
    // Predicated region
    $region6: #{tpu_custom_call.1} parent=1 // pred_check
      _
    $region7: #{tpu_custom_call.1} parent=1 // pred_check_branch
      %17 = sbr.rel (0) target = $region9
    $region8: #{tpu_custom_call.1} parent=1 // pred_region
      _
    $region9: #{tpu_custom_call.1} parent=1 // pred_fallthru
      _
    // Predicated region
    $region10: #{tpu_custom_call.1} parent=1 // pred_check
      _
    $region11: #{tpu_custom_call.1} parent=1 // pred_check_branch
      %19 = sbr.rel (0) target = $region13
    $region12: #{tpu_custom_call.1} parent=1 // pred_region
      _
    $region13: #{tpu_custom_call.1} parent=1 // pred_fallthru
      _
    // Predicated region
    $region14: #{tpu_custom_call.1} parent=1 // pred_check
      _
    $region15: #{tpu_custom_call.1} parent=1 // pred_check_branch
      %21 = sbr.rel (0) target = $region17
    $region16: #{tpu_custom_call.1} parent=1 // pred_region
      _
    $region17: #{tpu_custom_call.1} parent=1 // pred_fallthru
      _
    // Predicated region
    $region18: #{tpu_custom_call.1} parent=1 // pred_check
      _
    $region19: #{tpu_custom_call.1} parent=1 // pred_check_branch
      %23 = sbr.rel (0) target = $region21
    $region20: #{tpu_custom_call.1} parent=1 // pred_region
      _
    $region21: #{tpu_custom_call.1} parent=1 // pred_fallthru
      _
    // Predicated region
    $region22: #{tpu_custom_call.1} parent=1 // pred_check
      _
    $region23: #{tpu_custom_call.1} parent=1 // pred_check_branch
      %25 = sbr.rel (0) target = $region25
    $region24: #{tpu_custom_call.1} parent=1 // pred_region
      _
    $region25: #{tpu_custom_call.1} parent=1 // pred_fallthru
      _
    // Predicated region
    $region26: #{tpu_custom_call.1} parent=1 // pred_check
      _
    $region27: #{tpu_custom_call.1} parent=1 // pred_check_branch
      %27 = sbr.rel (0) target = $region29
    $region28: #{tpu_custom_call.1} parent=1 // pred_region
      _
    $region29: #{tpu_custom_call.1} parent=1 // pred_fallthru
      _
    %v29 = vld [vmem:[%s0] sm:$0xff]
    %v30 = vld [vmem:[%s0 + $0x8] sm:$0xff]
    %v31 = vld [vmem:[%s0 + $0x10] sm:$0xff]
    %v32 = vld [vmem:[%s0 + $0x18] sm:$0xff]
    %v33 = vld [vmem:[%s0 + $0x20] sm:$0xff]
    %v34 = vld [vmem:[%s0 + $0x28] sm:$0xff]
    %v35 = vld [vmem:[%s0 + $0x30] sm:$0xff]
    %v36 = vld [vmem:[%s0 + $0x38] sm:$0xff]
    %v37 = vld [vmem:[%s0 + $0x40] sm:$0xff]
    %v38 = vld [vmem:[%s0 + $0x48] sm:$0xff]
    %v39 = vld [vmem:[%s0 + $0x50] sm:$0xff]
    %v40 = vld [vmem:[%s0 + $0x58] sm:$0xff]
    %v41 = vld [vmem:[%s0 + $0x60] sm:$0xff]
    %v42 = vld [vmem:[%s0 + $0x68] sm:$0xff]
    %v43 = vld [vmem:[%s0 + $0x70] sm:$0xff]
    %v44 = vld [vmem:[%s0 + $0x78] sm:$0xff]
    %v45 = vpack.c.bf16 %v30, %v29
    %v46 = vpack.c.bf16 %v32, %v31
    %v47 = vpack.c.bf16 %v34, %v33
    %v48 = vpack.c.bf16 %v36, %v35
    %v49 = vpack.c.bf16 %v38, %v37
    %v50 = vpack.c.bf16 %v40, %v39
    %v51 = vpack.c.bf16 %v42, %v41
    %v52 = vpack.c.bf16 %v44, %v43
    %v53 = vld [vmem:[%s1] sm:$0xf]
    %v54 = vld [vmem:[%s1 + $0x4] sm:$0xf]
    %v55 = vld [vmem:[%s2] sm:$0x1]
    %v57 = vperm.slane %v55, 0
    %v61 = vunpack.c.l.b16 %v53
    %v62 = vunpack.c.l.b16 %v54
    %v63 = vpack.c.b16 %v62, %v61
    %vm65 = vcmask 130048
    %v67 = vsel %vm65, %v45, 0
    %v70 = vsel %vm65, %v46, 0
    %v73 = vsel %vm65, %v47, 0
    %v76 = vsel %vm65, %v48, 0
    %v79 = vsel %vm65, %v49, 0
    %v82 = vsel %vm65, %v50, 0
    %v85 = vsel %vm65, %v51, 0
    %v88 = vsel %vm65, %v52, 0
    %90 = vmatpush.bf16.msra.mxu0 0
    %91 = vmatpush.bf16.msra.mxu0 0
    %92 = vmatpush.bf16.msra.mxu0 0
    %93 = vmatpush.bf16.msra.mxu0 0
    %94 = vmatpush.bf16.msra.mxu0 0
    %95 = vmatpush.bf16.msra.mxu0 0
    %96 = vmatpush.bf16.msra.mxu0 0
    %97 = vmatpush.bf16.msra.mxu0 %v63
    %98 = vmatmul.bf16.gmra.mxu0 %v67
    %v99 = vpop.f32.mrf.mxu0
    %v100 = vadd.f32 %v57, %v99
    %v101 = vpop.f32.mrf.mxu0
    %v102 = vadd.f32 %v57, %v101
    %103 = vmatmul.bf16.gmra.mxu0 %v70
    %v104 = vpop.f32.mrf.mxu0
    %v105 = vadd.f32 %v57, %v104
    %v106 = vpop.f32.mrf.mxu0
    %v107 = vadd.f32 %v57, %v106
    %108 = vmatmul.bf16.gmra.mxu0 %v73
    %v109 = vpop.f32.mrf.mxu0
    %v110 = vadd.f32 %v57, %v109
    %v111 = vpop.f32.mrf.mxu0
    %v112 = vadd.f32 %v57, %v111
    %113 = vmatmul.bf16.gmra.mxu0 %v76
    %v114 = vpop.f32.mrf.mxu0
    %v115 = vadd.f32 %v57, %v114
    %v116 = vpop.f32.mrf.mxu0
    %v117 = vadd.f32 %v57, %v116
    %118 = vmatmul.bf16.gmra.mxu0 %v79
    %v119 = vpop.f32.mrf.mxu0
    %v120 = vadd.f32 %v57, %v119
    %v121 = vpop.f32.mrf.mxu0
    %v122 = vadd.f32 %v57, %v121
    %123 = vmatmul.bf16.gmra.mxu0 %v82
    %v124 = vpop.f32.mrf.mxu0
    %v125 = vadd.f32 %v57, %v124
    %v126 = vpop.f32.mrf.mxu0
    %v127 = vadd.f32 %v57, %v126
    %128 = vmatmul.bf16.gmra.mxu0 %v85
    %v129 = vpop.f32.mrf.mxu0
    %v130 = vadd.f32 %v57, %v129
    %v131 = vpop.f32.mrf.mxu0
    %v132 = vadd.f32 %v57, %v131
    %133 = vmatmul.bf16.gmra.mxu0 %v88
    %v134 = vpop.f32.mrf.mxu0
    %v135 = vadd.f32 %v57, %v134
    %v136 = vpop.f32.mrf.mxu0
    %v137 = vadd.f32 %v57, %v136
    %138 = vdwg.mxu0
    %v139 = vmax.f32 %v100, 0.0
    %v140 = vmax.f32 %v102, 0.0
    %v141 = vmax.f32 %v105, 0.0
    %v142 = vmax.f32 %v107, 0.0
    %v143 = vmax.f32 %v110, 0.0
    %v144 = vmax.f32 %v112, 0.0
    %v145 = vmax.f32 %v115, 0.0
    %v146 = vmax.f32 %v117, 0.0
    %v147 = vmax.f32 %v120, 0.0
    %v148 = vmax.f32 %v122, 0.0
    %v149 = vmax.f32 %v125, 0.0
    %v150 = vmax.f32 %v127, 0.0
    %v151 = vmax.f32 %v130, 0.0
    %v152 = vmax.f32 %v132, 0.0
    %v153 = vmax.f32 %v135, 0.0
    %v154 = vmax.f32 %v137, 0.0
    %v155 = vpack.c.bf16 %v140, %v139
    %v156 = vpack.c.bf16 %v142, %v141
    %v157 = vpack.c.bf16 %v144, %v143
    %v158 = vpack.c.bf16 %v146, %v145
    %v159 = vpack.c.bf16 %v148, %v147
    %v160 = vpack.c.bf16 %v150, %v149
    %v161 = vpack.c.bf16 %v152, %v151
    %v162 = vpack.c.bf16 %v154, %v153
    %v163 = vld [vmem:[%s3] sm:$0xf]
    %v164 = vld [vmem:[%s3 + $0x4] sm:$0xf]
    %v165 = vld [vmem:[%s3 + $0x8] sm:$0xf]
    %v166 = vld [vmem:[%s3 + $0xc] sm:$0xf]
    %v167 = vld [vmem:[%s4] sm:$0x1]
    %v169 = vperm.slane %v167, 0
    %v175 = vunpack.c.l.b16 %v163
    %v176 = vunpack.c.l.b16 %v164
    %v177 = vunpack.c.l.b16 %v165
    %v178 = vunpack.c.l.b16 %v166
    %v179 = vpack.c.b16 %v176, %v175
    %v180 = vpack.c.b16 %v178, %v177
    %vm183 = vcmask 261120
    %v185 = vsel %vm183, %v155, 0
    %v188 = vsel %vm183, %v156, 0
    %v191 = vsel %vm183, %v157, 0
    %v194 = vsel %vm183, %v158, 0
    %v197 = vsel %vm183, %v159, 0
    %v200 = vsel %vm183, %v160, 0
    %v203 = vsel %vm183, %v161, 0
    %v206 = vsel %vm183, %v162, 0
    %208 = vmatpush.bf16.msra.mxu0 0
    %209 = vmatpush.bf16.msra.mxu0 0
    %210 = vmatpush.bf16.msra.mxu0 0
    %211 = vmatpush.bf16.msra.mxu0 0
    %212 = vmatpush.bf16.msra.mxu0 0
    %213 = vmatpush.bf16.msra.mxu0 0
    %214 = vmatpush.bf16.msra.mxu0 %v180
    %215 = vmatpush.bf16.msra.mxu0 %v179
    %216 = vmatmul.bf16.gmra.mxu0 %v185
    %v217 = vpop.f32.mrf.mxu0
    %v218 = vadd.f32 %v169, %v217
    %v219 = vpop.f32.mrf.mxu0
    %v220 = vadd.f32 %v169, %v219
    %221 = vmatmul.bf16.gmra.mxu0 %v188
    %v222 = vpop.f32.mrf.mxu0
    %v223 = vadd.f32 %v169, %v222
    %v224 = vpop.f32.mrf.mxu0
    %v225 = vadd.f32 %v169, %v224
    %226 = vmatmul.bf16.gmra.mxu0 %v191
    %v227 = vpop.f32.mrf.mxu0
    %v228 = vadd.f32 %v169, %v227
    %v229 = vpop.f32.mrf.mxu0
    %v230 = vadd.f32 %v169, %v229
    %231 = vmatmul.bf16.gmra.mxu0 %v194
    %v232 = vpop.f32.mrf.mxu0
    %v233 = vadd.f32 %v169, %v232
    %v234 = vpop.f32.mrf.mxu0
    %v235 = vadd.f32 %v169, %v234
    %236 = vmatmul.bf16.gmra.mxu0 %v197
    %v237 = vpop.f32.mrf.mxu0
    %v238 = vadd.f32 %v169, %v237
    %v239 = vpop.f32.mrf.mxu0
    %v240 = vadd.f32 %v169, %v239
    %241 = vmatmul.bf16.gmra.mxu0 %v200
    %v242 = vpop.f32.mrf.mxu0
    %v243 = vadd.f32 %v169, %v242
    %v244 = vpop.f32.mrf.mxu0
    %v245 = vadd.f32 %v169, %v244
    %246 = vmatmul.bf16.gmra.mxu0 %v203
    %v247 = vpop.f32.mrf.mxu0
    %v248 = vadd.f32 %v169, %v247
    %v249 = vpop.f32.mrf.mxu0
    %v250 = vadd.f32 %v169, %v249
    %251 = vmatmul.bf16.gmra.mxu0 %v206
    %v252 = vpop.f32.mrf.mxu0
    %v253 = vadd.f32 %v169, %v252
    %v254 = vpop.f32.mrf.mxu0
    %v255 = vadd.f32 %v169, %v254
    %256 = vdwg.mxu0
    %v257 = vmax.f32 %v218, 0.0
    %v258 = vmax.f32 %v220, 0.0
    %v259 = vmax.f32 %v223, 0.0
    %v260 = vmax.f32 %v225, 0.0
    %v261 = vmax.f32 %v228, 0.0
    %v262 = vmax.f32 %v230, 0.0
    %v263 = vmax.f32 %v233, 0.0
    %v264 = vmax.f32 %v235, 0.0
    %v265 = vmax.f32 %v238, 0.0
    %v266 = vmax.f32 %v240, 0.0
    %v267 = vmax.f32 %v243, 0.0
    %v268 = vmax.f32 %v245, 0.0
    %v269 = vmax.f32 %v248, 0.0
    %v270 = vmax.f32 %v250, 0.0
    %v271 = vmax.f32 %v253, 0.0
    %v272 = vmax.f32 %v255, 0.0
    %v273 = vld [vmem:[%s5] sm:$0x1]
    %s274 = sld [smem:[#allocation2]]
    %v275 = vstv %s274
    %v277 = vsel %vm65, %v273, 0
    %v280 = vsel %vm65, %v257, 0
    %v283 = vsel %vm65, %v258, 0
    %v286 = vsel %vm65, %v259, 0
    %v289 = vsel %vm65, %v260, 0
    %v292 = vsel %vm65, %v261, 0
    %v295 = vsel %vm65, %v262, 0
    %v298 = vsel %vm65, %v263, 0
    %v301 = vsel %vm65, %v264, 0
    %v304 = vsel %vm65, %v265, 0
    %v307 = vsel %vm65, %v266, 0
    %v310 = vsel %vm65, %v267, 0
    %v313 = vsel %vm65, %v268, 0
    %v316 = vsel %vm65, %v269, 0
    %v319 = vsel %vm65, %v270, 0
    %v322 = vsel %vm65, %v271, 0
    %v325 = vsel %vm65, %v272, 0
    %327 = vmatpush.xpose.msra.mxu0 %v325
    %328 = vmatpush.xpose.msra.mxu0 %v322
    %329 = vmatpush.xpose.msra.mxu0 %v319
    %330 = vmatpush.xpose.msra.mxu0 %v316
    %331 = vmatpush.xpose.msra.mxu0 %v313
    %332 = vmatpush.xpose.msra.mxu0 %v310
    %333 = vmatpush.xpose.msra.mxu0 %v307
    %334 = vmatpush.xpose.msra.mxu0 %v304
    %335 = vmatpush.xpose.msra.mxu0 %v301
    %336 = vmatpush.xpose.msra.mxu0 %v298
    %337 = vmatpush.xpose.msra.mxu0 %v295
    %338 = vmatpush.xpose.msra.mxu0 %v292
    %339 = vmatpush.xpose.msra.mxu0 %v289
    %340 = vmatpush.xpose.msra.mxu0 %v286
    %341 = vmatpush.xpose.msra.mxu0 %v283
    %342 = vmatpush.xpose.msra.mxu0 %v280
    %343 = vmatmul.f32.gmra.mxu0 %v277
    %v344 = vpop.f32.mrf.mxu0
    %v345 = vadd.f32 %v275, %v344
    %346 = vdwg.mxu0
    %347 = vst [vmem:[#allocation3] sm:$0x1] %v345
    // Predicated region
    $region30: #{tpu_custom_call.1} parent=1 // pred_check
      _
    $region31: #{tpu_custom_call.1} parent=1 // pred_check_branch
      %349 = sbr.rel (0) target = $region33
    $region32: #{tpu_custom_call.1} parent=1 // pred_region
      %351 = vsyncadd [#allocation4], 0
      %s353 = sshll.u32 [#allocation3], 4
      %s354 = int_to_ptr.vmem [resolvable:$true] %s353
      %s355 = sshll.u32 %s7, 4
      %s356 = int_to_ptr.hbm [resolvable:$true] %s355
      %358 = dma.vmem_to_hbm [thread:$0]  %s354, 16, %s356, [#allocation4]
    $region33: #{tpu_custom_call.1} parent=1 // pred_fallthru
      _
    // Predicated region
    $region34: #{tpu_custom_call.1} parent=1 // pred_check
      _
    $region35: #{tpu_custom_call.1} parent=1 // pred_check_branch
      %360 = sbr.rel (0) target = $region37
    $region36: #{tpu_custom_call.1} parent=1 // pred_region
      %362 = dma.done [#allocation4], 16
    $region37: #{tpu_custom_call.1} parent=1 // pred_fallthru
      _
    %363 = vsyncpa [#allocation4], 1

</llo_original>
